<compile_context>
chip_gen: v6e
topology: v6e:2x2x1
jax: 0.10.0
libtpu: 0.0.40
codegen_flags: <defaults>
</compile_context>

<pallas_src>
import functools

import jax
import jax.numpy as jnp
from jax import lax
from jax.experimental import pallas as pl
from jax.experimental.pallas import tpu as pltpu

EPS = 1e-5
LANE = 128
SUBLANE = 8
# Largest per-group feature block (rows * lanes * 4B) the fused single-block
# path will take on; beyond this the two-phase lane-tiled path keeps the
# working set well inside VMEM on v7x (64 MiB) as well as v5e/v6e.
_FUSED_BLOCK_BYTES = 2 << 20


def _round_up(x, m):
    return ((x + m - 1) // m) * m


# --------------------------------------------------------------------------
# Shared math helpers (used both inside kernels and, for the tiled path's
# coefficient stage, on tiny (G, rows, 1) arrays in plain JAX).
# --------------------------------------------------------------------------
def _rain_moments(feat, mask):
    """One elementwise sweep producing all row-wise moments.

    feat: (R, L), mask: (M, L) with M in {1, R} (numpy broadcasting).
    Returns s1, s2 (unweighted), a1, a2 (mask-weighted), q1, q2 (mask^2-
    weighted), n1 = sum(mask), n2 = sum(mask^2); background moments are later
    derived by subtraction, so no second reduction pass is needed.
    """
    f2 = feat * feat
    fm = feat * mask
    f2m = fm * feat          # feat^2 * mask
    fm2 = fm * mask          # feat   * mask^2
    f2m2 = fm * fm           # feat^2 * mask^2
    m2 = mask * mask         # (M, L): row-sized, cheap

    def rsum(x):
        return jnp.sum(x, axis=-1, keepdims=True)

    return (rsum(feat), rsum(f2), rsum(fm), rsum(f2m),
            rsum(fm2), rsum(f2m2), rsum(mask), rsum(m2))


def _rain_coeffs(s1, s2, a1, a2, q1, q2, n1, n2,
                 g_fg, b_fg, g_bg, b_bg, hw_valid):
    """Per-row affine coefficients so that out = feat*A + B per region."""
    n_fg = n1
    n_bg = hw_valid - n1                     # background count over valid lanes
    inv_nfg = 1.0 / (n_fg + EPS)
    inv_nbg = 1.0 / (n_bg + EPS)

    mean_fg = a1 * inv_nfg
    mean_bg = (s1 - a1) * inv_nbg

    # sum((w*(x-mean))^2) expanded into precomputed moments; clamp guards
    # against tiny negative values from f32 cancellation.
    sq_fg = jnp.maximum(q2 - 2.0 * mean_fg * q1 + mean_fg * mean_fg * n2, 0.0)
    bg_w2_x2 = s2 - 2.0 * a2 + q2            # sum((1-mask)^2 * feat^2)
    bg_w2_x1 = s1 - 2.0 * a1 + q1            # sum((1-mask)^2 * feat)
    bg_w2 = hw_valid - 2.0 * n1 + n2         # sum((1-mask)^2) over valid lanes
    sq_bg = jnp.maximum(
        bg_w2_x2 - 2.0 * mean_bg * bg_w2_x1 + mean_bg * mean_bg * bg_w2, 0.0)

    r_fg = sq_fg * inv_nfg + EPS
    r_bg = sq_bg * inv_nbg + EPS
    inv_std_fg = lax.rsqrt(r_fg)             # EUP, keeps divides off the VPU
    inv_std_bg = lax.rsqrt(r_bg)
    std_bg = r_bg * inv_std_bg               # == sqrt(r_bg)

    a_bg_c = g_bg * inv_std_bg
    b_bg_c = b_bg - mean_bg * a_bg_c
    ratio = std_bg * inv_std_fg
    a_fg_c = g_fg * ratio
    b_fg_c = g_fg * (mean_bg - mean_fg * ratio) + b_fg
    return a_fg_c, b_fg_c, a_bg_c, b_bg_c


# --------------------------------------------------------------------------
# Kernels
# --------------------------------------------------------------------------
def _rain_fused_kernel(feat_ref, mask_ref, params_ref, out_ref, *, hw_valid):
    # feat_ref  : (1, RB, L)   rows = (batch, channel) pairs
    # mask_ref  : (1, MB, L)   MB == 1 (shared per-batch mask) or MB == RB
    # params_ref: (4, RB, 1)   [1+fg_gamma, fg_beta, 1+bg_gamma, bg_beta]
    # out_ref   : (1, RB, L)
    feat = feat_ref[0]
    mask = mask_ref[0]

    s1, s2, a1, a2, q1, q2, n1, n2 = _rain_moments(feat, mask)
    a_fg, b_fg, a_bg, b_bg = _rain_coeffs(
        s1, s2, a1, a2, q1, q2, n1, n2,
        params_ref[0], params_ref[1], params_ref[2], params_ref[3], hw_valid)

    # single apply pass: out = feat*A + B
    coef_a = a_bg + mask * (a_fg - a_bg)
    coef_b = b_bg + mask * (b_fg - b_bg)
    out_ref[0] = feat * coef_a + coef_b
    # TODO(synk): the PyTorch module prints mean/std stats (host-side side
    # effect, not compute) -- omitted here.


def _rain_stats_kernel(feat_ref, mask_ref, mom_ref):
    # feat_ref : (1, RB, TL), mask_ref : (1, MB, TL)
    # mom_ref  : (1, 8, RB, 1) output-resident accumulator across lane tiles.
    t = pl.program_id(1)
    feat = feat_ref[0]
    mask = mask_ref[0]
    rows = feat.shape[0]

    moments = _rain_moments(feat, mask)

    @pl.when(t == 0)
    def _():
        mom_ref[...] = jnp.zeros_like(mom_ref)

    for k, v in enumerate(moments):
        mom_ref[0, k] += jnp.broadcast_to(v, (rows, 1))


def _rain_apply_kernel(feat_ref, mask_ref, coef_ref, out_ref):
    # feat_ref : (1, RB, TL), mask_ref : (1, MB, TL)
    # coef_ref : (1, 4, RB, 1) = [A_fg, B_fg, A_bg, B_bg] per row (resident)
    feat = feat_ref[0]
    mask = mask_ref[0]
    a_fg = coef_ref[0, 0]
    b_fg = coef_ref[0, 1]
    a_bg = coef_ref[0, 2]
    b_bg = coef_ref[0, 3]
    coef_a = a_bg + mask * (a_fg - a_bg)
    coef_b = b_bg + mask * (b_fg - b_bg)
    out_ref[0] = feat * coef_a + coef_b


# --------------------------------------------------------------------------
# Wrapper
# --------------------------------------------------------------------------
def _nearest_resize_nchw(mask, out_hw):
    """PyTorch F.interpolate(mode='nearest'): src = floor(dst * in / out).
    Exact for integer ratios; may differ by one pixel for non-integer ratios."""
    N, C, H, W = mask.shape
    OH, OW = out_hw
    hi = (jnp.arange(OH) * H) // OH
    wi = (jnp.arange(OW) * W) // OW
    return mask[:, :, hi, :][:, :, :, wi]


def rain_forward(feat, mask, fg_gamma, fg_beta, bg_gamma, bg_beta, *,
                 lane_block=None):
    """feat: (N, C, H, W) f32; mask: (N, 1, h, w) f32; params: (1, C, 1, 1) f32.

    lane_block: None -> auto (fused single-block path when it fits VMEM,
    otherwise lane-tiled two-phase path); an int forces the tiled path with
    that lane-tile size (rounded up to a multiple of 128).
    """
    N, C, H, W = feat.shape
    HW = H * W

    mask_rs = _nearest_resize_nchw(mask, (H, W)).astype(jnp.float32).reshape(N, 1, HW)
    feat_flat = feat.astype(jnp.float32).reshape(N, C, HW)

    # hoist the (1 + gamma) adds out of the kernel
    params_c = jnp.stack(
        [1.0 + fg_gamma.reshape(C), fg_beta.reshape(C),
         1.0 + bg_gamma.reshape(C), bg_beta.reshape(C)], axis=0)  # (4, C)

    # Pack 8//C batch elements per grid step when C under-fills the 8 sublanes.
    if C < SUBLANE and SUBLANE % C == 0 and N % (SUBLANE // C) == 0:
        pack = SUBLANE // C
    else:
        pack = 1
    G = N // pack
    RB = pack * C

    # Path selection + lane padding.
    L0 = _round_up(HW, LANE)
    use_tiled = (lane_block is not None) or (RB * L0 * 4 > _FUSED_BLOCK_BYTES)
    if use_tiled:
        if lane_block is None:
            # ~1 MiB feature tile per block, lane-multiple.
            lane_block = max(LANE, ((1 << 20) // (RB * 4)) // LANE * LANE)
        TL = min(_round_up(HW, LANE), _round_up(lane_block, LANE))
        L = _round_up(HW, TL)
    else:
        TL = None
        L = L0
    pad = L - HW
    if pad:
        # zero-padded lanes: feat = 0 and mask = 0 -> excluded from fg AND bg
        # stats (bg counts use the true H*W, not sum(1 - mask)).
        feat_flat = jnp.pad(feat_flat, ((0, 0), (0, 0), (0, pad)))
        mask_rs = jnp.pad(mask_rs, ((0, 0), (0, 0), (0, pad)))

    feat3 = feat_flat.reshape(G, RB, L)
    if pack > 1:
        # per-row mask (each packed batch element brings its own mask rows)
        # TODO(synk): replicating the mask C times costs extra HBM reads for
        # the packed small-C case; an in-kernel sublane broadcast would avoid it.
        mask3 = jnp.broadcast_to(mask_rs, (N, C, L)).reshape(G, RB, L)
        MB = RB
    else:
        mask3 = mask_rs.reshape(G, 1, L)
        MB = 1
    # per-row params: channel pattern repeats `pack` times inside a row group
    params3 = jnp.tile(params_c[:, None, :], (1, pack, 1)).reshape(4, RB, 1)

    hw_valid = float(HW)

    if not use_tiled:
        # ---------------- fused single-block path ----------------
        block_bytes = 4 * L * (2 * RB + MB)      # feat + out + mask, one copy
        vmem_limit = int(min(32 << 20, max(16 << 20, 8 * block_bytes)))
        kernel = functools.partial(_rain_fused_kernel, hw_valid=hw_valid)
        out3 = pl.pallas_call(
            kernel,
            out_shape=jax.ShapeDtypeStruct((G, RB, L), jnp.float32),
            grid=(G,),
            in_specs=[
                pl.BlockSpec((1, RB, L), lambda g: (g, 0, 0)),
                pl.BlockSpec((1, MB, L), lambda g: (g, 0, 0)),
                pl.BlockSpec((4, RB, 1), lambda g: (0, 0, 0)),   # resident
            ],
            out_specs=pl.BlockSpec((1, RB, L), lambda g: (g, 0, 0)),
            compiler_params=pltpu.CompilerParams(
                dimension_semantics=("parallel",),
                vmem_limit_bytes=vmem_limit,
            ),
        )(feat3, mask3, params3)
    else:
        # ---------------- lane-tiled two-phase path ----------------
        T = L // TL
        tile_bytes = 4 * TL * (2 * RB + MB)
        vmem_limit = int(min(32 << 20, max(16 << 20, 12 * tile_bytes)))

        # Phase 1: per-row moments accumulated across lane tiles.
        mom = pl.pallas_call(
            _rain_stats_kernel,
            out_shape=jax.ShapeDtypeStruct((G, 8, RB, 1), jnp.float32),
            grid=(G, T),
            in_specs=[
                pl.BlockSpec((1, RB, TL), lambda g, t: (g, 0, t)),
                pl.BlockSpec((1, MB, TL), lambda g, t: (g, 0, t)),
            ],
            out_specs=pl.BlockSpec((1, 8, RB, 1), lambda g, t: (g, 0, 0, 0)),
            compiler_params=pltpu.CompilerParams(
                dimension_semantics=("parallel", "arbitrary"),
                vmem_limit_bytes=vmem_limit,
            ),
        )(feat3, mask3)

        # Tiny per-row coefficient math in plain JAX (G * RB scalars).
        s1, s2, a1, a2, q1, q2, n1, n2 = [mom[:, k] for k in range(8)]
        a_fg, b_fg, a_bg, b_bg = _rain_coeffs(
            s1, s2, a1, a2, q1, q2, n1, n2,
            params3[0], params3[1], params3[2], params3[3], hw_valid)
        coefs = jnp.stack([a_fg, b_fg, a_bg, b_bg], axis=1)     # (G, 4, RB, 1)

        # Phase 2: single fused apply sweep, lane-dense stores.
        out3 = pl.pallas_call(
            _rain_apply_kernel,
            out_shape=jax.ShapeDtypeStruct((G, RB, L), jnp.float32),
            grid=(G, T),
            in_specs=[
                pl.BlockSpec((1, RB, TL), lambda g, t: (g, 0, t)),
                pl.BlockSpec((1, MB, TL), lambda g, t: (g, 0, t)),
                pl.BlockSpec((1, 4, RB, 1), lambda g, t: (g, 0, 0, 0)),
            ],
            out_specs=pl.BlockSpec((1, RB, TL), lambda g, t: (g, 0, t)),
            compiler_params=pltpu.CompilerParams(
                dimension_semantics=("parallel", "parallel"),
                vmem_limit_bytes=vmem_limit,
            ),
        )(feat3, mask3, coefs)

    out = out3.reshape(N, C, L)[:, :, :HW].reshape(N, C, H, W)
    return out


# --------------------------------------------------------------------------
# Pure-JAX reference mirroring the PyTorch forward (two-pass formula)
# --------------------------------------------------------------------------
def rain_reference(feat, mask, fg_gamma, fg_beta, bg_gamma, bg_beta):
    N, C, H, W = feat.shape
    mask = _nearest_resize_nchw(mask, (H, W)).astype(jnp.float32)
    rev_mask = 1.0 - mask

    def stats(m):
        summ = jnp.sum(feat * m, axis=(2, 3), keepdims=True)
        num = jnp.sum(m, axis=(2, 3), keepdims=True)
        mean = summ / (num + EPS)
        sqr = jnp.sum(((feat - mean) * m) ** 2, axis=(2, 3), keepdims=True)
        std = jnp.sqrt(sqr / (num + EPS) + EPS)
        return mean, std

    mean_bg, std_bg = stats(rev_mask)
    normed_bg = (feat - mean_bg) / std_bg
    affine_bg = (normed_bg * (1.0 + bg_gamma) + bg_beta) * rev_mask
    mean_fg, std_fg = stats(mask)
    normed_fg = (feat - mean_fg) / std_fg * std_bg + mean_bg
    affine_fg = (normed_fg * (1.0 + fg_gamma) + fg_beta) * mask
    return affine_fg + affine_bg


if __name__ == "__main__":
    N, C, H, W = 2, 4, 16, 16
    key = jax.random.PRNGKey(0)
    k_feat, k_mask, k_g1, k_b1, k_g2, k_b2 = jax.random.split(key, 6)

    feat = jax.random.normal(k_feat, (N, C, H, W), dtype=jnp.float32)
    # coarse binary mask at half resolution, nearest-upsampled inside forward
    mask = (jax.random.uniform(k_mask, (N, 1, H // 2, W // 2)) > 0.5).astype(jnp.float32)

    # Module's __init__ uses zeros; use small deterministic values to exercise
    # the affine path.
    fg_gamma = 0.1 * jax.random.normal(k_g1, (1, C, 1, 1), dtype=jnp.float32)
    fg_beta = 0.1 * jax.random.normal(k_b1, (1, C, 1, 1), dtype=jnp.float32)
    bg_gamma = 0.1 * jax.random.normal(k_g2, (1, C, 1, 1), dtype=jnp.float32)
    bg_beta = 0.1 * jax.random.normal(k_b2, (1, C, 1, 1), dtype=jnp.float32)

    ref = rain_reference(feat, mask, fg_gamma, fg_beta, bg_gamma, bg_beta)

    # Fused single-block path (default for this size).
    out = rain_forward(feat, mask, fg_gamma, fg_beta, bg_gamma, bg_beta)
    out = jax.block_until_ready(out)
    assert out.shape == (N, C, H, W)
    assert float(jnp.max(jnp.abs(out - ref))) < 1e-4

    # Lane-tiled two-phase path (forced small tile -> 2 lane tiles per group)
    # to exercise the cross-tile moment accumulation and apply kernels.
    out_tiled = rain_forward(feat, mask, fg_gamma, fg_beta, bg_gamma, bg_beta,
                             lane_block=128)
    out_tiled = jax.block_until_ready(out_tiled)
    assert out_tiled.shape == (N, C, H, W)
    assert float(jnp.max(jnp.abs(out_tiled - ref))) < 1e-4

    print("KERNEL_OK")
</pallas_src>

<mosaic_0001>
module attributes {stable_mosaic.version = 11 : i64} {
  func.func @_rain_fused_kernel(%arg0: i32, %arg1: memref<1x8x256xf32, #tpu.memory_space<vmem>>, %arg2: memref<1x8x256xf32, #tpu.memory_space<vmem>>, %arg3: memref<4x8x1xf32, #tpu.memory_space<vmem>>, %arg4: memref<1x8x256xf32, #tpu.memory_space<vmem>>) attributes {dimension_semantics = [#tpu.dimension_semantics<parallel>], iteration_bounds = array<i64: 1>, scalar_prefetch = 0 : i64, scratch_operands = 0 : i64, tpu.core_type = #tpu.core_type<tc>, window_params = [{transform_indices = @transform_0, window_bounds = array<i64: 1, 8, 256>}, {transform_indices = @transform_1, window_bounds = array<i64: 1, 8, 256>}, {pipeline_mode = #tpu.pipeline_mode<synchronous>, transform_indices = @transform_2, window_bounds = array<i64: 4, 8, 1>}, {transform_indices = @transform_3, window_bounds = array<i64: 1, 8, 256>}]} {
    %c0 = arith.constant 0 : index
    %c0_0 = arith.constant 0 : index
    %c0_1 = arith.constant 0 : index
    %0 = vector.load %arg1[%c0, %c0_0, %c0_1] : memref<1x8x256xf32, #tpu.memory_space<vmem>>, vector<1x8x256xf32>
    %1 = vector.shape_cast %0 : vector<1x8x256xf32> to vector<8x256xf32>
    %c0_2 = arith.constant 0 : index
    %c0_3 = arith.constant 0 : index
    %c0_4 = arith.constant 0 : index
    %2 = vector.load %arg2[%c0_2, %c0_3, %c0_4] : memref<1x8x256xf32, #tpu.memory_space<vmem>>, vector<1x8x256xf32>
    %3 = vector.shape_cast %2 : vector<1x8x256xf32> to vector<8x256xf32>
    %4 = arith.mulf %1, %1 : vector<8x256xf32>
    %5 = arith.mulf %1, %3 : vector<8x256xf32>
    %6 = arith.mulf %5, %1 : vector<8x256xf32>
    %7 = arith.mulf %5, %3 : vector<8x256xf32>
    %8 = arith.mulf %5, %5 : vector<8x256xf32>
    %9 = arith.mulf %3, %3 : vector<8x256xf32>
    %cst = arith.constant dense<0.000000e+00> : vector<8xf32>
    %10 = vector.multi_reduction <add>, %1, %cst [1] : vector<8x256xf32> to vector<8xf32>
    %11 = vector.shape_cast %10 : vector<8xf32> to vector<8x1xf32>
    %cst_5 = arith.constant dense<0.000000e+00> : vector<8xf32>
    %12 = vector.multi_reduction <add>, %4, %cst_5 [1] : vector<8x256xf32> to vector<8xf32>
    %13 = vector.shape_cast %12 : vector<8xf32> to vector<8x1xf32>
    %cst_6 = arith.constant dense<0.000000e+00> : vector<8xf32>
    %14 = vector.multi_reduction <add>, %5, %cst_6 [1] : vector<8x256xf32> to vector<8xf32>
    %15 = vector.shape_cast %14 : vector<8xf32> to vector<8x1xf32>
    %cst_7 = arith.constant dense<0.000000e+00> : vector<8xf32>
    %16 = vector.multi_reduction <add>, %6, %cst_7 [1] : vector<8x256xf32> to vector<8xf32>
    %17 = vector.shape_cast %16 : vector<8xf32> to vector<8x1xf32>
    %cst_8 = arith.constant dense<0.000000e+00> : vector<8xf32>
    %18 = vector.multi_reduction <add>, %7, %cst_8 [1] : vector<8x256xf32> to vector<8xf32>
    %19 = vector.shape_cast %18 : vector<8xf32> to vector<8x1xf32>
    %cst_9 = arith.constant dense<0.000000e+00> : vector<8xf32>
    %20 = vector.multi_reduction <add>, %8, %cst_9 [1] : vector<8x256xf32> to vector<8xf32>
    %21 = vector.shape_cast %20 : vector<8xf32> to vector<8x1xf32>
    %cst_10 = arith.constant dense<0.000000e+00> : vector<8xf32>
    %22 = vector.multi_reduction <add>, %3, %cst_10 [1] : vector<8x256xf32> to vector<8xf32>
    %23 = vector.shape_cast %22 : vector<8xf32> to vector<8x1xf32>
    %cst_11 = arith.constant dense<0.000000e+00> : vector<8xf32>
    %24 = vector.multi_reduction <add>, %9, %cst_11 [1] : vector<8x256xf32> to vector<8xf32>
    %25 = vector.shape_cast %24 : vector<8xf32> to vector<8x1xf32>
    %c0_12 = arith.constant 0 : index
    %c0_13 = arith.constant 0 : index
    %c0_14 = arith.constant 0 : index
    %26 = vector.load %arg3[%c0_12, %c0_13, %c0_14] : memref<4x8x1xf32, #tpu.memory_space<vmem>>, vector<1x8x1xf32>
    %27 = vector.shape_cast %26 : vector<1x8x1xf32> to vector<8x1xf32>
    %c1 = arith.constant 1 : index
    %c0_15 = arith.constant 0 : index
    %c0_16 = arith.constant 0 : index
    %28 = vector.load %arg3[%c1, %c0_15, %c0_16] : memref<4x8x1xf32, #tpu.memory_space<vmem>>, vector<1x8x1xf32>
    %29 = vector.shape_cast %28 : vector<1x8x1xf32> to vector<8x1xf32>
    %c2 = arith.constant 2 : index
    %c0_17 = arith.constant 0 : index
    %c0_18 = arith.constant 0 : index
    %30 = vector.load %arg3[%c2, %c0_17, %c0_18] : memref<4x8x1xf32, #tpu.memory_space<vmem>>, vector<1x8x1xf32>
    %31 = vector.shape_cast %30 : vector<1x8x1xf32> to vector<8x1xf32>
    %c3 = arith.constant 3 : index
    %c0_19 = arith.constant 0 : index
    %c0_20 = arith.constant 0 : index
    %32 = vector.load %arg3[%c3, %c0_19, %c0_20] : memref<4x8x1xf32, #tpu.memory_space<vmem>>, vector<1x8x1xf32>
    %33 = vector.shape_cast %32 : vector<1x8x1xf32> to vector<8x1xf32>
    %cst_21 = arith.constant 2.560000e+02 : f32
    %34 = vector.broadcast %cst_21 : f32 to vector<8x1xf32>
    %35 = arith.subf %34, %23 : vector<8x1xf32>
    %cst_22 = arith.constant 9.99999974E-6 : f32
    %36 = vector.broadcast %cst_22 : f32 to vector<8x1xf32>
    %37 = arith.addf %23, %36 : vector<8x1xf32>
    %cst_23 = arith.constant 1.000000e+00 : f32
    %38 = vector.broadcast %cst_23 : f32 to vector<8x1xf32>
    %39 = arith.divf %38, %37 : vector<8x1xf32>
    %cst_24 = arith.constant 9.99999974E-6 : f32
    %40 = vector.broadcast %cst_24 : f32 to vector<8x1xf32>
    %41 = arith.addf %35, %40 : vector<8x1xf32>
    %cst_25 = arith.constant 1.000000e+00 : f32
    %42 = vector.broadcast %cst_25 : f32 to vector<8x1xf32>
    %43 = arith.divf %42, %41 : vector<8x1xf32>
    %44 = arith.mulf %15, %39 : vector<8x1xf32>
    %45 = arith.subf %11, %15 : vector<8x1xf32>
    %46 = arith.mulf %45, %43 : vector<8x1xf32>
    %cst_26 = arith.constant 2.000000e+00 : f32
    %47 = vector.broadcast %cst_26 : f32 to vector<8x1xf32>
    %48 = arith.mulf %47, %44 : vector<8x1xf32>
    %49 = arith.mulf %48, %19 : vector<8x1xf32>
    %50 = arith.subf %21, %49 : vector<8x1xf32>
    %51 = arith.mulf %44, %44 : vector<8x1xf32>
    %52 = arith.mulf %51, %25 : vector<8x1xf32>
    %53 = arith.addf %50, %52 : vector<8x1xf32>
    %cst_27 = arith.constant 0.000000e+00 : f32
    %54 = vector.broadcast %cst_27 : f32 to vector<8x1xf32>
    %55 = arith.maximumf %53, %54 : vector<8x1xf32>
    %cst_28 = arith.constant 2.000000e+00 : f32
    %56 = vector.broadcast %cst_28 : f32 to vector<8x1xf32>
    %57 = arith.mulf %56, %17 : vector<8x1xf32>
    %58 = arith.subf %13, %57 : vector<8x1xf32>
    %59 = arith.addf %58, %21 : vector<8x1xf32>
    %cst_29 = arith.constant 2.000000e+00 : f32
    %60 = vector.broadcast %cst_29 : f32 to vector<8x1xf32>
    %61 = arith.mulf %60, %15 : vector<8x1xf32>
    %62 = arith.subf %11, %61 : vector<8x1xf32>
    %63 = arith.addf %62, %19 : vector<8x1xf32>
    %cst_30 = arith.constant 2.000000e+00 : f32
    %64 = vector.broadcast %cst_30 : f32 to vector<8x1xf32>
    %65 = arith.mulf %64, %23 : vector<8x1xf32>
    %cst_31 = arith.constant 2.560000e+02 : f32
    %66 = vector.broadcast %cst_31 : f32 to vector<8x1xf32>
    %67 = arith.subf %66, %65 : vector<8x1xf32>
    %68 = arith.addf %67, %25 : vector<8x1xf32>
    %cst_32 = arith.constant 2.000000e+00 : f32
    %69 = vector.broadcast %cst_32 : f32 to vector<8x1xf32>
    %70 = arith.mulf %69, %46 : vector<8x1xf32>
    %71 = arith.mulf %70, %63 : vector<8x1xf32>
    %72 = arith.subf %59, %71 : vector<8x1xf32>
    %73 = arith.mulf %46, %46 : vector<8x1xf32>
    %74 = arith.mulf %73, %68 : vector<8x1xf32>
    %75 = arith.addf %72, %74 : vector<8x1xf32>
    %cst_33 = arith.constant 0.000000e+00 : f32
    %76 = vector.broadcast %cst_33 : f32 to vector<8x1xf32>
    %77 = arith.maximumf %75, %76 : vector<8x1xf32>
    %78 = arith.mulf %55, %39 : vector<8x1xf32>
    %cst_34 = arith.constant 9.99999974E-6 : f32
    %79 = vector.broadcast %cst_34 : f32 to vector<8x1xf32>
    %80 = arith.addf %78, %79 : vector<8x1xf32>
    %81 = arith.mulf %77, %43 : vector<8x1xf32>
    %cst_35 = arith.constant 9.99999974E-6 : f32
    %82 = vector.broadcast %cst_35 : f32 to vector<8x1xf32>
    %83 = arith.addf %81, %82 : vector<8x1xf32>
    %84 = math.rsqrt %80 : vector<8x1xf32>
    %85 = math.rsqrt %83 : vector<8x1xf32>
    %86 = arith.mulf %83, %85 : vector<8x1xf32>
    %87 = arith.mulf %31, %85 : vector<8x1xf32>
    %88 = arith.mulf %46, %87 : vector<8x1xf32>
    %89 = arith.subf %33, %88 : vector<8x1xf32>
    %90 = arith.mulf %86, %84 : vector<8x1xf32>
    %91 = arith.mulf %27, %90 : vector<8x1xf32>
    %92 = arith.mulf %44, %90 : vector<8x1xf32>
    %93 = arith.subf %46, %92 : vector<8x1xf32>
    %94 = arith.mulf %27, %93 : vector<8x1xf32>
    %95 = arith.addf %94, %29 : vector<8x1xf32>
    %96 = arith.subf %91, %87 : vector<8x1xf32>
    %97 = vector.broadcast %96 : vector<8x1xf32> to vector<8x256xf32>
    %98 = arith.mulf %3, %97 : vector<8x256xf32>
    %99 = vector.broadcast %87 : vector<8x1xf32> to vector<8x256xf32>
    %100 = arith.addf %99, %98 : vector<8x256xf32>
    %101 = arith.subf %95, %89 : vector<8x1xf32>
    %102 = vector.broadcast %101 : vector<8x1xf32> to vector<8x256xf32>
    %103 = arith.mulf %3, %102 : vector<8x256xf32>
    %104 = vector.broadcast %89 : vector<8x1xf32> to vector<8x256xf32>
    %105 = arith.addf %104, %103 : vector<8x256xf32>
    %106 = arith.mulf %1, %100 : vector<8x256xf32>
    %107 = arith.addf %106, %105 : vector<8x256xf32>
    %c0_36 = arith.constant 0 : index
    %c0_37 = arith.constant 0 : index
    %c0_38 = arith.constant 0 : index
    %108 = vector.load %arg4[%c0_36, %c0_37, %c0_38] : memref<1x8x256xf32, #tpu.memory_space<vmem>>, vector<1x8x256xf32>
    %109 = vector.shape_cast %108 : vector<1x8x256xf32> to vector<8x256xf32>
    %110 = vector.shape_cast %107 : vector<8x256xf32> to vector<1x8x256xf32>
    tpu.vector_store %arg4[%c0_36, %c0_37, %c0_38], %110 {strides = array<i32>} : memref<1x8x256xf32, #tpu.memory_space<vmem>>, vector<1x8x256xf32>,
    return
  }
  func.func @transform_0(%arg0: i32) -> (i32, i32, i32) {
    %c0_i32 = arith.constant 0 : i32
    %c0_i32_0 = arith.constant 0 : i32
    %c0_i32_1 = arith.constant 0 : i32
    return %arg0, %c0_i32, %c0_i32_0 : i32, i32, i32
  }
  func.func @transform_1(%arg0: i32) -> (i32, i32, i32) {
    %c0_i32 = arith.constant 0 : i32
    %c0_i32_0 = arith.constant 0 : i32
    %c0_i32_1 = arith.constant 0 : i32
    return %arg0, %c0_i32, %c0_i32_0 : i32, i32, i32
  }
  func.func @transform_2(%arg0: i32) -> (i32, i32, i32) {
    %c0_i32 = arith.constant 0 : i32
    %c0_i32_0 = arith.constant 0 : i32
    %c0_i32_1 = arith.constant 0 : i32
    %c0_i32_2 = arith.constant 0 : i32
    return %c0_i32, %c0_i32_0, %c0_i32_1 : i32, i32, i32
  }
  func.func @transform_3(%arg0: i32) -> (i32, i32, i32) {
    %c0_i32 = arith.constant 0 : i32
    %c0_i32_0 = arith.constant 0 : i32
    %c0_i32_1 = arith.constant 0 : i32
    return %arg0, %c0_i32, %c0_i32_0 : i32, i32, i32
  }
}

</mosaic_0001>

<llo_original>
// kernel: tpu_custom_call.1
$region0: #{tpu_custom_call.1}
  #allocation0 [shape = 'u32[]', space=smem, size = 0x4, offset = 0x4, fixed_abs, tag = 'smem constant byte address 0x4 - core index']
  #allocation1 [shape = 'u32[144,128]{1,0:T(1,128)}', space=vmem, size = 0x12000, scoped, tag = 'internal scratch']
  %s0 = inlined_call_operand.vmem [shape: f32[1,8,256], index: 0, kind: input, shape index: {}]
  %s1 = inlined_call_operand.vmem [shape: f32[1,8,256], index: 1, kind: input, shape index: {}]
  %s2 = inlined_call_operand.vmem [shape: f32[4,8,1], index: 2, kind: input, shape index: {}]
  %s3 = inlined_call_operand.hbm [shape: f32[1,8,256], index: 3, kind: output, shape index: {}]
  %s4 = sld [smem:[#allocation0]]
  $region22: #{tpu_custom_call.1} parent=0
    _
  %s6 = ssub.s32 1, %s4
  %s7 = scalar_select 0, %s6, %s4
  $region1: #{tpu_custom_call.1} parent=0
    #allocation2 [shape = 'u8[8192]{0}', space=vmem, size = 0x2000, scoped, tag = 'output window, operand 0, single buffered']
    #allocation3 [shape = 's32[1]{0}', space=sflag, size = 0x4, scoped, tag = 'scoped memory for tpu_custom_call.1']
    %8 = vsyncpa [#allocation3], 0
    // Predicated region
    $region2: #{tpu_custom_call.1} parent=1 // pred_check
      _
    $region3: #{tpu_custom_call.1} parent=1 // pred_check_branch
      %10 = sbr.rel (0) target = $region5
    $region4: #{tpu_custom_call.1} parent=1 // pred_region
      _
    $region5: #{tpu_custom_call.1} parent=1 // pred_fallthru
      _
    // Predicated region
    $region6: #{tpu_custom_call.1} parent=1 // pred_check
      _
    $region7: #{tpu_custom_call.1} parent=1 // pred_check_branch
      %12 = sbr.rel (0) target = $region9
    $region8: #{tpu_custom_call.1} parent=1 // pred_region
      _
    $region9: #{tpu_custom_call.1} parent=1 // pred_fallthru
      _
    // Predicated region
    $region10: #{tpu_custom_call.1} parent=1 // pred_check
      _
    $region11: #{tpu_custom_call.1} parent=1 // pred_check_branch
      %14 = sbr.rel (0) target = $region13
    $region12: #{tpu_custom_call.1} parent=1 // pred_region
      _
    $region13: #{tpu_custom_call.1} parent=1 // pred_fallthru
      _
    %v15 = vld [vmem:[%s0] sm:$0xff]
    %v16 = vld [vmem:[%s0 + $0x8] sm:$0xff]
    %v17 = vld [vmem:[%s1] sm:$0xff]
    %v18 = vld [vmem:[%s1 + $0x8] sm:$0xff]
    %v19 = vmul.f32 %v15, %v15
    %v20 = vmul.f32 %v16, %v16
    %v21 = vmul.f32 %v15, %v17
    %v22 = vmul.f32 %v16, %v18
    %v23 = vmul.f32 %v21, %v15
    %v24 = vmul.f32 %v22, %v16
    %v25 = vmul.f32 %v21, %v17
    %v26 = vmul.f32 %v22, %v18
    %v27 = vmul.f32 %v21, %v21
    %v28 = vmul.f32 %v22, %v22
    %v29 = vmul.f32 %v17, %v17
    %v30 = vmul.f32 %v18, %v18
    %v31 = vadd.f32 %v15, %v16
    %32 = vadd.xlane.f32.xlu0 %v31
    %v33 = vpop.xlane.xlu0 %32
    %v34 = vadd.f32 %v19, %v20
    %35 = vadd.xlane.f32.xlu0 %v34
    %v36 = vpop.xlane.xlu0 %35
    %v37 = vadd.f32 %v21, %v22
    %38 = vadd.xlane.f32.xlu0 %v37
    %v39 = vpop.xlane.xlu0 %38
    %v40 = vadd.f32 %v23, %v24
    %41 = vadd.xlane.f32.xlu0 %v40
    %v42 = vpop.xlane.xlu0 %41
    %v43 = vadd.f32 %v25, %v26
    %44 = vadd.xlane.f32.xlu0 %v43
    %v45 = vpop.xlane.xlu0 %44
    %v46 = vadd.f32 %v27, %v28
    %47 = vadd.xlane.f32.xlu0 %v46
    %v48 = vpop.xlane.xlu0 %47
    %v49 = vadd.f32 %v17, %v18
    %50 = vadd.xlane.f32.xlu0 %v49
    %v51 = vpop.xlane.xlu0 %50
    %v52 = vadd.f32 %v29, %v30
    %53 = vadd.xlane.f32.xlu0 %v52
    %v54 = vpop.xlane.xlu0 %53
    %v55 = vld [vmem:[%s2] sm:$0xff]
    %s56 = scalar_lea.vmem %s2, 8
    %v57 = vld [vmem:[%s56] sm:$0xff]
    %s58 = scalar_lea.vmem %s2, 16
    %v59 = vld [vmem:[%s58] sm:$0xff]
    %s60 = scalar_lea.vmem %s2, 24
    %v61 = vld [vmem:[%s60] sm:$0xff]
    %v62 = vsub.f32 256.0, %v51
    %v63 = vadd.f32 %v51, 1e-05
    %v64 = vrcp.pop %v63
    %v65 = vmul.f32 1.0, %v64
    %v66 = vadd.f32 %v62, 1e-05
    %v67 = vrcp.pop %v66
    %v68 = vmul.f32 1.0, %v67
    %v69 = vmul.f32 %v39, %v65
    %v70 = vsub.f32 %v33, %v39
    %v71 = vmul.f32 %v70, %v68
    %v72 = vmul.f32 %v69, 2.0
    %v73 = vmul.f32 %v72, %v45
    %v74 = vsub.f32 %v48, %v73
    %v75 = vmul.f32 %v69, %v69
    %v76 = vmul.f32 %v75, %v54
    %v77 = vadd.f32 %v74, %v76
    %v78 = vmax.f32 %v77, 0.0
    %v79 = vmul.f32 %v42, 2.0
    %v80 = vsub.f32 %v36, %v79
    %v81 = vadd.f32 %v80, %v48
    %v82 = vmul.f32 %v39, 2.0
    %v83 = vsub.f32 %v33, %v82
    %v84 = vadd.f32 %v83, %v45
    %v85 = vmul.f32 %v51, 2.0
    %v86 = vsub.f32 256.0, %v85
    %v87 = vadd.f32 %v86, %v54
    %v88 = vmul.f32 %v71, 2.0
    %v89 = vmul.f32 %v88, %v84
    %v90 = vsub.f32 %v81, %v89
    %v91 = vmul.f32 %v71, %v71
    %v92 = vmul.f32 %v91, %v87
    %v93 = vadd.f32 %v90, %v92
    %v94 = vmax.f32 %v93, 0.0
    %v95 = vmul.f32 %v78, %v65
    %v96 = vadd.f32 %v95, 1e-05
    %v97 = vmul.f32 %v94, %v68
    %v98 = vadd.f32 %v97, 1e-05
    %v99 = vrsqrt.pop %v96
    %v100 = vrsqrt.pop %v98
    %v101 = vmul.f32 %v98, %v100
    %v102 = vmul.f32 %v59, %v100
    %v103 = vmul.f32 %v71, %v102
    %v104 = vsub.f32 %v61, %v103
    %v105 = vmul.f32 %v101, %v99
    %v106 = vmul.f32 %v55, %v105
    %v107 = vmul.f32 %v69, %v105
    %v108 = vsub.f32 %v71, %v107
    %v109 = vmul.f32 %v55, %v108
    %v110 = vadd.f32 %v109, %v57
    %v111 = vsub.f32 %v106, %v102
    %113 = vset.pattern.permute.xlu0 0
    %114 = vperm.xlu0 %113, %v111
    %v115 = vpop.permute.xlu0 %114
    %v117 = vmul.f32 %v17, %v115
    %v118 = vmul.f32 %v18, %v115
    %120 = vset.pattern.permute.xlu0 0
    %121 = vperm.xlu0 %120, %v102
    %v122 = vpop.permute.xlu0 %121
    %v124 = vadd.f32 %v122, %v117
    %v125 = vadd.f32 %v122, %v118
    %v126 = vsub.f32 %v110, %v104
    %128 = vset.pattern.permute.xlu0 0
    %129 = vperm.xlu0 %128, %v126
    %v130 = vpop.permute.xlu0 %129
    %v132 = vmul.f32 %v17, %v130
    %v133 = vmul.f32 %v18, %v130
    %135 = vset.pattern.permute.xlu0 0
    %136 = vperm.xlu0 %135, %v104
    %v137 = vpop.permute.xlu0 %136
    %v139 = vadd.f32 %v137, %v132
    %v140 = vadd.f32 %v137, %v133
    %v141 = vmul.f32 %v15, %v124
    %v142 = vmul.f32 %v16, %v125
    %v143 = vadd.f32 %v141, %v139
    %v144 = vadd.f32 %v142, %v140
    %145 = vst [vmem:[#allocation2] sm:$0xff] %v143
    %146 = vst [vmem:[#allocation2 + $0x8] sm:$0xff] %v144
    // Predicated region
    $region14: #{tpu_custom_call.1} parent=1 // pred_check
      _
    $region15: #{tpu_custom_call.1} parent=1 // pred_check_branch
      %148 = sbr.rel (0) target = $region17
    $region16: #{tpu_custom_call.1} parent=1 // pred_region
      %s150 = ssub.s32 256, 256
      %151 = vsyncadd [#allocation3], %s150
      %s153 = sshll.u32 [#allocation2], 4
      %s154 = int_to_ptr.vmem [resolvable:$true] %s153
      %156 = dma.vmem_to_hbm [thread:$0]  %s154, 256, %s3, [#allocation3]
    $region17: #{tpu_custom_call.1} parent=1 // pred_fallthru
      _
    // Predicated region
    $region18: #{tpu_custom_call.1} parent=1 // pred_check
      _
    $region19: #{tpu_custom_call.1} parent=1 // pred_check_branch
      %158 = sbr.rel (0) target = $region21
    $region20: #{tpu_custom_call.1} parent=1 // pred_region
      %159 = dma.done [#allocation3], 256
    $region21: #{tpu_custom_call.1} parent=1 // pred_fallthru
      _
    %160 = vsyncpa [#allocation3], 1

</llo_original>
